<compile_context>
chip_gen: v7x
topology: tpu7x:2x2x1
jax: 0.10.0
libtpu: 0.0.40
codegen_flags: <defaults>
</compile_context>

<pallas_src>
import functools

import jax
import jax.numpy as jnp
from jax.experimental import pallas as pl
from jax.experimental.pallas import tpu as pltpu

_LANES = 128
_SMALL_BATCH_MAX = 512          # gridless single-call path threshold
_RESIDENT_W_MAX_BYTES = 16 << 20  # above this, stream the weight over Din
_VMEM_CAP_BYTES = 64 << 20      # never request more scoped VMEM than v7x has


def _round_up(x, m):
    return (x + m - 1) // m * m


def _cdiv(a, b):
    return (a + b - 1) // b


# ---------------------------------------------------------------------------
# Kernels
# ---------------------------------------------------------------------------
def _vae_fused_kernel(h_ref, w_ref, b_ref, out_ref):
    # One fused MXU matmul for both heads; f32 accumulation, f32 bias add.
    acc = jnp.dot(h_ref[...], w_ref[...], preferred_element_type=jnp.float32)
    out_ref[...] = (acc + b_ref[...]).astype(out_ref.dtype)


def _vae_fused_kernel_ktiled(h_ref, w_ref, b_ref, out_ref, acc_ref):
    # Streams the fused weight over a K (Din) grid axis; f32 VMEM accumulator.
    k = pl.program_id(1)

    @pl.when(k == 0)
    def _():
        acc_ref[...] = jnp.zeros_like(acc_ref)

    acc_ref[...] += jnp.dot(h_ref[...], w_ref[...],
                            preferred_element_type=jnp.float32)

    @pl.when(k == pl.num_programs(1) - 1)
    def _():
        out_ref[...] = (acc_ref[...] + b_ref[...]).astype(out_ref.dtype)


# ---------------------------------------------------------------------------
# Forward (jitted per (shape, dtype); meta args are baked via partial)
# ---------------------------------------------------------------------------
def _vae_forward(h, w, b, *, dout, d_head, batch_tile, din_tile):
    B, Din = h.shape
    d_fused = w.shape[1]
    out_dtype = h.dtype

    # Cast h to the (cached) compute dtype of the fused weight (no-op if same).
    h_in = h.astype(w.dtype) if h.dtype != w.dtype else h

    h_item = jnp.dtype(w.dtype).itemsize
    w_item = jnp.dtype(w.dtype).itemsize
    out_item = jnp.dtype(out_dtype).itemsize

    # Honest cost estimate: useful flops / bytes only (not padded width).
    cost = pl.CostEstimate(
        flops=2 * B * Din * 2 * dout,
        transcendentals=0,
        bytes_accessed=(B * Din * h_item + Din * d_fused * w_item
                        + d_fused * 4 + B * 2 * dout * out_item),
    )

    if B <= min(batch_tile, _SMALL_BATCH_MAX):
        # Tiny problem: single gridless call, everything resident in VMEM
        # (no pipeline prologue/epilogue, no double buffering).
        out = pl.pallas_call(
            _vae_fused_kernel,
            out_shape=jax.ShapeDtypeStruct((B, d_fused), out_dtype),
            in_specs=[
                pl.BlockSpec(memory_space=pltpu.MemorySpace.VMEM),
                pl.BlockSpec(memory_space=pltpu.MemorySpace.VMEM),
                pl.BlockSpec(memory_space=pltpu.MemorySpace.VMEM),
            ],
            out_specs=pl.BlockSpec(memory_space=pltpu.MemorySpace.VMEM),
            cost_estimate=cost,
        )(h_in, w, b)
    else:
        # Streaming path: pick tb so there are >= 2 batch tiles (keeps both
        # v7x TensorCores busy); no jnp.pad — Pallas clips the ragged tile.
        tb = min(batch_tile, max(256, _round_up(_cdiv(B, 2), 256)))
        num_b = _cdiv(B, tb)

        use_ktile = (din_tile is not None and din_tile < Din
                     and Din % din_tile == 0 and din_tile % _LANES == 0)

        if use_ktile:
            tk = din_tile
            num_k = Din // tk
            vmem_needed = (2 * (tb * tk * h_item + tk * d_fused * w_item)
                           + 2 * tb * d_fused * out_item
                           + tb * d_fused * 4          # f32 accumulator
                           + 2 * d_fused * 4)
            grid_spec = pltpu.PrefetchScalarGridSpec(
                num_scalar_prefetch=0,
                grid=(num_b, num_k),
                in_specs=[
                    pl.BlockSpec((tb, tk), lambda i, k: (i, k)),
                    pl.BlockSpec((tk, d_fused), lambda i, k: (k, 0)),
                    pl.BlockSpec((1, d_fused), lambda i, k: (0, 0)),
                ],
                out_specs=pl.BlockSpec((tb, d_fused), lambda i, k: (i, 0)),
                scratch_shapes=[pltpu.VMEM((tb, d_fused), jnp.float32)],
            )
            kernel = _vae_fused_kernel_ktiled
            dims = ("parallel", "arbitrary")
        else:
            # Fused weight + bias stay resident (constant index_map).
            vmem_needed = (2 * (tb * Din * h_item + tb * d_fused * out_item)
                           + 2 * (Din * d_fused * w_item + d_fused * 4))
            grid_spec = pltpu.PrefetchScalarGridSpec(
                num_scalar_prefetch=0,
                grid=(num_b,),
                in_specs=[
                    pl.BlockSpec((tb, Din), lambda i: (i, 0)),
                    pl.BlockSpec((Din, d_fused), lambda i: (0, 0)),
                    pl.BlockSpec((1, d_fused), lambda i: (0, 0)),
                ],
                out_specs=pl.BlockSpec((tb, d_fused), lambda i: (i, 0)),
            )
            kernel = _vae_fused_kernel
            dims = ("parallel",)

        vmem_limit = int(min(max(vmem_needed * 5 // 4 + (4 << 20), 16 << 20),
                             _VMEM_CAP_BYTES))
        out = pl.pallas_call(
            kernel,
            out_shape=jax.ShapeDtypeStruct((B, d_fused), out_dtype),
            grid_spec=grid_spec,
            compiler_params=pltpu.CompilerParams(
                dimension_semantics=dims,
                vmem_limit_bytes=vmem_limit),
            cost_estimate=cost,
        )(h_in, w, b)

    mu = out[:, :dout]
    var = out[:, d_head:d_head + dout]
    return mu, var


# ---------------------------------------------------------------------------
# Module-style wrapper: fuses the two heads ONCE at construction.
# ---------------------------------------------------------------------------
class VAEParamKernel:
    """forward(h) -> (mu, var) with mu = h @ Wmu + bmu, var = h @ Wvar + bvar.

    Weights are stored transposed vs. torch.nn.Linear.weight: (Din, Dout).
    compute_dtype=bfloat16 by default (f32 MXU accumulation, f32 bias add);
    pass compute_dtype=None for exact f32 semantics of the PyTorch module.
    """

    def __init__(self, w_mu, b_mu, w_var, b_var, *,
                 compute_dtype=jnp.bfloat16, batch_tile=2048, din_tile=None):
        Din, Dout = w_mu.shape
        assert w_var.shape == (Din, Dout)
        assert b_mu.shape == (Dout,) and b_var.shape == (Dout,)

        # Lane-align each head when Dout >= 128 (mu at 0, var at the next
        # 128-aligned column); for small heads keep the packed, unpadded
        # width to minimise HBM writeback on the streaming path.
        if Dout >= _LANES and Dout % _LANES != 0:
            d_head = _round_up(Dout, _LANES)
        else:
            d_head = Dout
        d_fused = 2 * d_head

        if d_head == Dout:
            w = jnp.concatenate([w_mu, w_var], axis=1)
            b = jnp.concatenate([b_mu, b_var]).astype(jnp.float32)[None, :]
        else:
            w = jnp.zeros((Din, d_fused), dtype=w_mu.dtype)
            w = w.at[:, :Dout].set(w_mu).at[:, d_head:d_head + Dout].set(w_var)
            b = jnp.zeros((1, d_fused), dtype=jnp.float32)
            b = b.at[0, :Dout].set(b_mu.astype(jnp.float32))
            b = b.at[0, d_head:d_head + Dout].set(b_var.astype(jnp.float32))

        if compute_dtype is not None:
            w = w.astype(compute_dtype)

        # Auto-enable Din streaming if the resident fused weight is too large
        # for scoped VMEM (matters on v7x's 64 MiB VMEM).
        if din_tile is None and w.size * w.dtype.itemsize > _RESIDENT_W_MAX_BYTES:
            for cand in (512, 256, 128):
                if Din % cand == 0:
                    din_tile = cand
                    break

        self.w = w
        self.b = b
        self.dout = Dout
        self.d_head = d_head
        self._fn = jax.jit(functools.partial(
            _vae_forward, dout=Dout, d_head=d_head,
            batch_tile=batch_tile, din_tile=din_tile))

    def __call__(self, h):
        return self._fn(h, self.w, self.b)


def _init_linear(key, in_dim, out_dim):
    # Deterministic init mimicking nn.Linear default (uniform +-1/sqrt(in_dim)).
    kw, kb = jax.random.split(key)
    bound = 1.0 / jnp.sqrt(in_dim)
    w = jax.random.uniform(kw, (in_dim, out_dim), jnp.float32, -bound, bound)
    b = jax.random.uniform(kb, (out_dim,), jnp.float32, -bound, bound)
    return w, b


if __name__ == "__main__":
    key = jax.random.PRNGKey(0)
    k_h, k_mu, k_var, k_big, k_h2, k_mu2, k_var2 = jax.random.split(key, 7)

    # --- Small gridless path, f32 compute: exact module semantics. ----------
    B, input_dim, bottleneck_dim = 8, 32, 16
    h = jax.random.normal(k_h, (B, input_dim), jnp.float32)
    w_mu, b_mu = _init_linear(k_mu, input_dim, bottleneck_dim)
    w_var, b_var = _init_linear(k_var, input_dim, bottleneck_dim)

    mod_f32 = VAEParamKernel(w_mu, b_mu, w_var, b_var, compute_dtype=None)
    mu, var = mod_f32(h)
    jax.block_until_ready((mu, var))
    mu_ref = h @ w_mu + b_mu
    var_ref = h @ w_var + b_var
    assert mu.shape == (B, bottleneck_dim) and var.shape == (B, bottleneck_dim)
    assert jnp.allclose(mu, mu_ref, atol=1e-5), "mu mismatch (small f32 path)"
    assert jnp.allclose(var, var_ref, atol=1e-5), "var mismatch (small f32 path)"

    # --- Streaming batch-tiled path, default bf16 operands / f32 accumulate.
    mod_bf16 = VAEParamKernel(w_mu, b_mu, w_var, b_var)   # defaults
    B_big = 600   # > 512 -> tiled grid with a ragged last tile (no jnp.pad)
    h_big = jax.random.normal(k_big, (B_big, input_dim), jnp.float32)
    mu_b, var_b = mod_bf16(h_big)
    jax.block_until_ready((mu_b, var_b))
    hb = h_big.astype(jnp.bfloat16)
    mu_b_ref = jnp.dot(hb, w_mu.astype(jnp.bfloat16),
                       preferred_element_type=jnp.float32) + b_mu
    var_b_ref = jnp.dot(hb, w_var.astype(jnp.bfloat16),
                        preferred_element_type=jnp.float32) + b_var
    assert jnp.allclose(mu_b, mu_b_ref, atol=2e-2, rtol=2e-2), \
        "mu mismatch (tiled path)"
    assert jnp.allclose(var_b, var_b_ref, atol=2e-2, rtol=2e-2), \
        "var mismatch (tiled path)"

    # --- K-tiled (Din-streamed) fallback path, forced via din_tile. ----------
    input_dim2, bottleneck_dim2 = 256, 16
    h2 = jax.random.normal(k_h2, (B_big, input_dim2), jnp.float32)
    w_mu2, b_mu2 = _init_linear(k_mu2, input_dim2, bottleneck_dim2)
    w_var2, b_var2 = _init_linear(k_var2, input_dim2, bottleneck_dim2)
    mod_k = VAEParamKernel(w_mu2, b_mu2, w_var2, b_var2, din_tile=128)
    mu_k, var_k = mod_k(h2)
    jax.block_until_ready((mu_k, var_k))
    h2b = h2.astype(jnp.bfloat16)
    mu_k_ref = jnp.dot(h2b, w_mu2.astype(jnp.bfloat16),
                       preferred_element_type=jnp.float32) + b_mu2
    var_k_ref = jnp.dot(h2b, w_var2.astype(jnp.bfloat16),
                        preferred_element_type=jnp.float32) + b_var2
    assert jnp.allclose(mu_k, mu_k_ref, atol=2e-2, rtol=2e-2), \
        "mu mismatch (K-tiled path)"
    assert jnp.allclose(var_k, var_k_ref, atol=2e-2, rtol=2e-2), \
        "var mismatch (K-tiled path)"

    print("KERNEL_OK")
</pallas_src>

<mosaic_0001>
module attributes {stable_mosaic.version = 11 : i64} {
  func.func @_vae_fused_kernel(%arg0: memref<8x32xf32, #tpu.memory_space<vmem>>, %arg1: memref<32x32xf32, #tpu.memory_space<vmem>>, %arg2: memref<1x32xf32, #tpu.memory_space<vmem>>, %arg3: memref<8x32xf32, #tpu.memory_space<vmem>>) attributes {dimension_semantics = [], scalar_prefetch = 0 : i64, scratch_operands = 0 : i64, tpu.core_type = #tpu.core_type<tc>} {
    %c0 = arith.constant 0 : index
    %c0_0 = arith.constant 0 : index
    %0 = vector.load %arg0[%c0, %c0_0] : memref<8x32xf32, #tpu.memory_space<vmem>>, vector<8x32xf32>
    %c0_1 = arith.constant 0 : index
    %c0_2 = arith.constant 0 : index
    %1 = vector.load %arg1[%c0_1, %c0_2] : memref<32x32xf32, #tpu.memory_space<vmem>>, vector<32x32xf32>
    %cst = arith.constant dense<0.000000e+00> : vector<8x32xf32>
    %2 = tpu.matmul %0, %1, %cst {dimension_numbers = #tpu.dot_dimension_numbers<[1], [0], [0], [1], [0, 0, 1, 1], [], []>} : vector<8x32xf32>, vector<32x32xf32>, vector<8x32xf32> -> vector<8x32xf32>
    %c0_3 = arith.constant 0 : index
    %c0_4 = arith.constant 0 : index
    %3 = vector.load %arg2[%c0_3, %c0_4] : memref<1x32xf32, #tpu.memory_space<vmem>>, vector<1x32xf32>
    %4 = vector.broadcast %3 : vector<1x32xf32> to vector<8x32xf32>
    %5 = arith.addf %2, %4 : vector<8x32xf32>
    %c0_5 = arith.constant 0 : index
    %c0_6 = arith.constant 0 : index
    %6 = vector.load %arg3[%c0_5, %c0_6] : memref<8x32xf32, #tpu.memory_space<vmem>>, vector<8x32xf32>
    tpu.vector_store %arg3[%c0_5, %c0_6], %5 {strides = array<i32>} : memref<8x32xf32, #tpu.memory_space<vmem>>, vector<8x32xf32>,
    return
  }
}

</mosaic_0001>

<llo_original>
// kernel: _vae_forward.1
$region0: #{_vae_forward.1}
  #allocation0 [shape = 'u32[]', space=smem, size = 0x4, offset = 0x4, fixed_abs, tag = 'smem constant byte address 0x4 - core index']
  #allocation1 [shape = 'u32[144,128]{1,0:T(1,128)}', space=vmem, size = 0x12000, scoped, tag = 'internal scratch']
  %s0 = inlined_call_operand.hbm [shape: f32[8,32], index: 0, kind: input, shape index: {}]
  %s1 = inlined_call_operand.hbm [shape: f32[32,32], index: 1, kind: input, shape index: {}]
  %s2 = inlined_call_operand.vmem [shape: f32[1,32], index: 2, kind: input, shape index: {}]
  %s3 = inlined_call_operand.vmem [shape: f32[8,32], index: 3, kind: output, shape index: {}]
  %s4 = sld [smem:[#allocation0]]
  $region30: #{_vae_forward.1} parent=0
    _
  %s6 = ssub.s32 1, %s4
  %s7 = scalar_select 0, %s6, %s4
  $region1: #{_vae_forward.1} parent=0
    #allocation2 [shape = 'u8[4096]{0}', space=vmem, size = 0x1000, scoped, tag = 'input window, operand 0, single buffered']
    #allocation3 [shape = 's32[1]{0}', space=sflag, size = 0x4, scoped, tag = 'scoped memory for _vae_forward.1']
    #allocation4 [shape = 'u8[16384]{0}', space=vmem, size = 0x4000, scoped, tag = 'input window, operand 1, single buffered']
    #allocation5 [shape = 's32[1]{0}', space=sflag, size = 0x4, scoped, tag = 'scoped memory for _vae_forward.1']
    %8 = vsyncpa [#allocation3], 0
    %9 = vsyncpa [#allocation5], 0
    // Predicated region
    $region2: #{_vae_forward.1} parent=1 // pred_check
      _
    $region3: #{_vae_forward.1} parent=1 // pred_check_branch
      %11 = sbr.rel (0) target = $region5
    $region4: #{_vae_forward.1} parent=1 // pred_region
      %s13 = ssub.s32 128, 128
      %14 = vsyncadd [#allocation3], %s13
      %s16 = sshll.u32 [#allocation2], 4
      %s17 = int_to_ptr.vmem [resolvable:$true] %s16
      %19 = dma.hbm_to_vmem [thread:$0]  %s0, 128, %s17, [#allocation3]
    $region5: #{_vae_forward.1} parent=1 // pred_fallthru
      _
    // Predicated region
    $region6: #{_vae_forward.1} parent=1 // pred_check
      _
    $region7: #{_vae_forward.1} parent=1 // pred_check_branch
      %21 = sbr.rel (0) target = $region9
    $region8: #{_vae_forward.1} parent=1 // pred_region
      %s23 = ssub.s32 512, 512
      %24 = vsyncadd [#allocation5], %s23
      %s25 = sshll.u32 [#allocation4], 4
      %s26 = int_to_ptr.vmem [resolvable:$true] %s25
      %31 = dma.hbm_to_vmem [thread:$0]  %s1, 512, %s26, [#allocation5], 128, 128, 8
    $region9: #{_vae_forward.1} parent=1 // pred_fallthru
      _
    // Predicated region
    $region10: #{_vae_forward.1} parent=1 // pred_check
      _
    $region11: #{_vae_forward.1} parent=1 // pred_check_branch
      %33 = sbr.rel (0) target = $region13
    $region12: #{_vae_forward.1} parent=1 // pred_region
      _
    $region13: #{_vae_forward.1} parent=1 // pred_fallthru
      _
    // Predicated region
    $region14: #{_vae_forward.1} parent=1 // pred_check
      _
    $region15: #{_vae_forward.1} parent=1 // pred_check_branch
      %35 = sbr.rel (0) target = $region17
    $region16: #{_vae_forward.1} parent=1 // pred_region
      %36 = dma.done [#allocation3], 128
    $region17: #{_vae_forward.1} parent=1 // pred_fallthru
      _
    // Predicated region
    $region18: #{_vae_forward.1} parent=1 // pred_check
      _
    $region19: #{_vae_forward.1} parent=1 // pred_check_branch
      %38 = sbr.rel (0) target = $region21
    $region20: #{_vae_forward.1} parent=1 // pred_region
      %39 = dma.done [#allocation5], 512
    $region21: #{_vae_forward.1} parent=1 // pred_fallthru
      _
    %v40 = vld [vmem:[#allocation2] sm:$0xff]
    %v41 = vld [vmem:[#allocation4] sm:$0xff]
    %v42 = vld [vmem:[#allocation4 + $0x8] sm:$0xff]
    %v43 = vld [vmem:[#allocation4 + $0x10] sm:$0xff]
    %v44 = vld [vmem:[#allocation4 + $0x18] sm:$0xff]
    %v45 = vld [vmem:[%s2] sm:$0x1]
    %v47 = vlaneseq
    %v48 = vshrl.u32 %v47, 7
    %v49 = vsub.s32 0, %v48
    %v50 = vrot.slane %v45, %v49
    %vm52 = vcmask 261120
    %v54 = vsel %vm52, %v40, 0
    %56 = vmatprep.subr.mxu0 0.0
    %57 = vmatpush1.msra.mxu0 %v41
    %58 = vmatprep.subr.mxu0 0.0
    %59 = vmatpush1.msra.mxu0 %v42
    %60 = vmatprep.subr.mxu0 0.0
    %61 = vmatpush1.msra.mxu0 %v43
    %62 = vmatprep.subr.mxu0 0.0
    %63 = vmatpush1.msra.mxu0 %v44
    %64 = vmatprep.subr.mxu0 0.0
    %65 = vmatpush1.msra.mxu0 0.0
    %66 = vmatprep.subr.mxu0 0.0
    %67 = vmatpush1.msra.mxu0 0.0
    %68 = vmatprep.subr.mxu0 0.0
    %69 = vmatpush1.msra.mxu0 0.0
    %70 = vmatprep.subr.mxu0 0.0
    %71 = vmatpush1.msra.mxu0 0.0
    %72 = vmatprep.subr.mxu0 0.0
    %73 = vmatpush1.msra.mxu0 0.0
    %74 = vmatprep.subr.mxu0 0.0
    %75 = vmatpush1.msra.mxu0 0.0
    %76 = vmatprep.subr.mxu0 0.0
    %77 = vmatpush1.msra.mxu0 0.0
    %78 = vmatprep.subr.mxu0 0.0
    %79 = vmatpush1.msra.mxu0 0.0
    %80 = vmatprep.subr.mxu0 0.0
    %81 = vmatpush1.msra.mxu0 0.0
    %82 = vmatprep.subr.mxu0 0.0
    %83 = vmatpush1.msra.mxu0 0.0
    %84 = vmatprep.subr.mxu0 0.0
    %85 = vmatpush1.msra.mxu0 0.0
    %86 = vmatprep.subr.mxu0 0.0
    %87 = vmatpush1.msra.mxu0 0.0
    %88 = vmatprep.subr.mxu0 0.0
    %89 = vmatpush1.msra.mxu0 0.0
    %90 = vmatprep.subr.mxu0 0.0
    %91 = vmatpush1.msra.mxu0 0.0
    %92 = vmatprep.subr.mxu0 0.0
    %93 = vmatpush1.msra.mxu0 0.0
    %94 = vmatprep.subr.mxu0 0.0
    %95 = vmatpush1.msra.mxu0 0.0
    %96 = vmatprep.subr.mxu0 0.0
    %97 = vmatpush1.msra.mxu0 0.0
    %98 = vmatprep.subr.mxu0 0.0
    %99 = vmatpush1.msra.mxu0 0.0
    %100 = vmatprep.subr.mxu0 0.0
    %101 = vmatpush1.msra.mxu0 0.0
    %102 = vmatprep.subr.mxu0 0.0
    %103 = vmatpush1.msra.mxu0 0.0
    %104 = vmatprep.subr.mxu0 0.0
    %105 = vmatpush1.msra.mxu0 0.0
    %106 = vmatprep.subr.mxu0 0.0
    %107 = vmatpush1.msra.mxu0 0.0
    %108 = vmatprep.subr.mxu0 0.0
    %109 = vmatpush1.msra.mxu0 0.0
    %110 = vmatprep.subr.mxu0 0.0
    %111 = vmatpush1.msra.mxu0 0.0
    %112 = vmatprep.subr.mxu0 0.0
    %113 = vmatpush1.msra.mxu0 0.0
    %114 = vmatprep.subr.mxu0 0.0
    %115 = vmatpush1.msra.mxu0 0.0
    %116 = vmatprep.subr.mxu0 0.0
    %117 = vmatpush1.msra.mxu0 0.0
    %118 = vmatprep.subr.mxu0 0.0
    %119 = vmatpush1.msra.mxu0 0.0
    %120 = vmatprep.mubr.f32.mxu0 0.0
    %121 = vmatmul.mubr.f32.gmra.mrb[0].mxu0 %v54
    %v122 = vpop.f32.mrb[0].mxu0
    %v123 = vadd.f32 %v50, %v122
    %v124 = vpop.f32.mrb[0].mxu0
    %125 = vdwg.mxu0
    %126 = vst.msk [vmem:[%s3] sm:$0xff] %vm52, %v123
    // Predicated region
    $region22: #{_vae_forward.1} parent=1 // pred_check
      _
    $region23: #{_vae_forward.1} parent=1 // pred_check_branch
      %128 = sbr.rel (0) target = $region25
    $region24: #{_vae_forward.1} parent=1 // pred_region
      _
    $region25: #{_vae_forward.1} parent=1 // pred_fallthru
      _
    // Predicated region
    $region26: #{_vae_forward.1} parent=1 // pred_check
      _
    $region27: #{_vae_forward.1} parent=1 // pred_check_branch
      %130 = sbr.rel (0) target = $region29
    $region28: #{_vae_forward.1} parent=1 // pred_region
      _
    $region29: #{_vae_forward.1} parent=1 // pred_fallthru
      _
    %131 = vsyncpa [#allocation3], 1
    %132 = vsyncpa [#allocation5], 1

</llo_original>
